<compile_context>
chip_gen: v7x
topology: tpu7x:2x2x1
jax: 0.10.0
libtpu: 0.0.40
codegen_flags: <defaults>
</compile_context>

<pallas_src>
import functools

import jax
import jax.numpy as jnp
from jax.experimental import pallas as pl
from jax.experimental.pallas import tpu as pltpu


def double_conv_kernel(
    x_ref,    # (Cin,  N*L)      lane-dense input, channels-major
    w1_ref,   # (Cout, 3*Cin)    im2col weights  [tap k=0 | k=1 | k=2]
    b1_ref,   # (Cout, 1)
    g1_ref,   # (Cout, 1)
    be1_ref,  # (Cout, 1)
    w2_ref,   # (Cout, 3*Cout)
    b2_ref,   # (Cout, 1)
    g2_ref,   # (Cout, 1)
    be2_ref,  # (Cout, 1)
    o_ref,    # (Cout, N*L)      lane-dense output
    pad1_ref,  # VMEM scratch (Cin,  N*L+2)  halo buffer for conv1 taps
    pad2_ref,  # VMEM scratch (Cout, N*L+2)  halo buffer for conv2 taps
    *,
    length,   # L (static)
    eps,
):
    nl = o_ref.shape[-1]

    # Per-lane position masks, computed once and reused by both convs.
    # Flattened position p = n*L + l ; the l-1 / l+1 taps must not bleed across
    # batch seams or the global edges ('same' zero padding).
    pos = jax.lax.broadcasted_iota(jnp.int32, (1, nl), 1) % length
    has_left = pos != 0               # tap at l-1 is valid
    has_right = pos != (length - 1)   # tap at l+1 is valid

    def conv_bn_relu(h, pad_ref, w2d_ref, b_ref, g_ref, be_ref):
        # h: (C, N*L).  Write into the halo scratch once; the two halo columns
        # (0 and nl+1) are never *used* — the jnp.where masks select 0 there.
        pad_ref[:, 1:nl + 1] = h
        left = jnp.where(has_left, pad_ref[:, 0:nl], 0.0)        # h[:, p-1]
        right = jnp.where(has_right, pad_ref[:, 2:nl + 2], 0.0)  # h[:, p+1]

        # Single im2col matmul on the MXU: (Cout, 3C) @ (3C, N*L), f32 acc.
        rhs = jnp.concatenate([left, h, right], axis=0)          # (3C, N*L)
        y = jnp.dot(w2d_ref[...], rhs, preferred_element_type=jnp.float32)
        y = y + b_ref[...]                                        # bias, once

        # Training-mode BatchNorm1d over the (N, L) lanes per channel (biased
        # variance), folded into a single scale/shift, then ReLU.
        mean = jnp.mean(y, axis=1, keepdims=True)                 # (C, 1)
        centered = y - mean
        var = jnp.mean(centered * centered, axis=1, keepdims=True)
        scale = g_ref[...] * jax.lax.rsqrt(var + eps)
        return jnp.maximum(centered * scale + be_ref[...], 0.0)

    h1 = conv_bn_relu(x_ref[...], pad1_ref, w1_ref, b1_ref, g1_ref, be1_ref)
    o_ref[...] = conv_bn_relu(h1, pad2_ref, w2_ref, b2_ref, g2_ref, be2_ref)


@jax.jit
def double_conv(x, w1, b1, g1, be1, w2, b2, g2, be2):
    n, c_in, length = x.shape
    c_out = w1.shape[0]
    nl = n * length

    # Layout plumbing on tiny tensors (wrapper side, as recommended):
    # lane-dense activations (Cin, N*L) and flattened im2col weights.
    xt = jnp.transpose(x, (1, 0, 2)).reshape(c_in, nl)
    w1_2d = jnp.transpose(w1, (0, 2, 1)).reshape(c_out, 3 * c_in)
    w2_2d = jnp.transpose(w2, (0, 2, 1)).reshape(c_out, 3 * c_out)

    vmem = pl.BlockSpec(memory_space=pltpu.MemorySpace.VMEM)
    kernel = functools.partial(double_conv_kernel, length=length, eps=1e-5)

    out2d = pl.pallas_call(
        kernel,
        out_shape=jax.ShapeDtypeStruct((c_out, nl), jnp.float32),
        in_specs=[vmem] * 9,
        out_specs=vmem,
        scratch_shapes=[
            pltpu.VMEM((c_in, nl + 2), jnp.float32),
            pltpu.VMEM((c_out, nl + 2), jnp.float32),
        ],
    )(xt, w1_2d, b1, g1, be1, w2_2d, b2, g2, be2)

    # (Cout, N*L) -> (N, Cout, L)
    return jnp.transpose(out2d.reshape(c_out, n, length), (1, 0, 2))


def _ref_forward(x, w1, b1, g1, be1, w2, b2, g2, be2, eps=1e-5):
    """Pure-JAX reference matching PyTorch forward (training-mode BN)."""

    def conv(x, w, b):
        y = jax.lax.conv_general_dilated(
            x, w, window_strides=(1,), padding=((1, 1),),
            dimension_numbers=("NCH", "OIH", "NCH"),
        )
        return y + b[None, :, :]

    def bn_relu(y, g, be):
        m = y.mean(axis=(0, 2), keepdims=True)
        v = ((y - m) ** 2).mean(axis=(0, 2), keepdims=True)
        return jnp.maximum(
            (y - m) / jnp.sqrt(v + eps) * g[None, :, :] + be[None, :, :], 0.0
        )

    y = bn_relu(conv(x, w1, b1), g1, be1)
    return bn_relu(conv(y, w2, b2), g2, be2)


if __name__ == "__main__":
    # Small shapes implied by the module: batch=2, in_ch=4, out_ch=8, length=16
    N, C_IN, C_OUT, L = 2, 4, 8, 16

    key = jax.random.PRNGKey(0)
    kx, kw1, kb1, kw2, kb2 = jax.random.split(key, 5)

    x = jax.random.normal(kx, (N, C_IN, L), jnp.float32)

    # Deterministic PyTorch-style init (uniform(-1/sqrt(fan_in), 1/sqrt(fan_in)))
    bound1 = 1.0 / (C_IN * 3) ** 0.5
    w1 = jax.random.uniform(kw1, (C_OUT, C_IN, 3), jnp.float32, -bound1, bound1)
    b1 = jax.random.uniform(kb1, (C_OUT, 1), jnp.float32, -bound1, bound1)
    bound2 = 1.0 / (C_OUT * 3) ** 0.5
    w2 = jax.random.uniform(kw2, (C_OUT, C_OUT, 3), jnp.float32, -bound2, bound2)
    b2 = jax.random.uniform(kb2, (C_OUT, 1), jnp.float32, -bound2, bound2)

    # BatchNorm affine params: PyTorch default init (gamma=1, beta=0)
    g1 = jnp.ones((C_OUT, 1), jnp.float32)
    be1 = jnp.zeros((C_OUT, 1), jnp.float32)
    g2 = jnp.ones((C_OUT, 1), jnp.float32)
    be2 = jnp.zeros((C_OUT, 1), jnp.float32)

    out = double_conv(x, w1, b1, g1, be1, w2, b2, g2, be2)
    out = jax.block_until_ready(out)

    ref = _ref_forward(x, w1, b1, g1, be1, w2, b2, g2, be2)
    assert out.shape == (N, C_OUT, L)
    assert jnp.allclose(out, ref, atol=1e-4, rtol=1e-4), "mismatch vs reference"

    print("KERNEL_OK")
</pallas_src>

<mosaic_0001>
module attributes {stable_mosaic.version = 11 : i64} {
  func.func @double_conv_kernel(%arg0: memref<4x32xf32, #tpu.memory_space<vmem>>, %arg1: memref<8x12xf32, #tpu.memory_space<vmem>>, %arg2: memref<8x1xf32, #tpu.memory_space<vmem>>, %arg3: memref<8x1xf32, #tpu.memory_space<vmem>>, %arg4: memref<8x1xf32, #tpu.memory_space<vmem>>, %arg5: memref<8x24xf32, #tpu.memory_space<vmem>>, %arg6: memref<8x1xf32, #tpu.memory_space<vmem>>, %arg7: memref<8x1xf32, #tpu.memory_space<vmem>>, %arg8: memref<8x1xf32, #tpu.memory_space<vmem>>, %arg9: memref<8x32xf32, #tpu.memory_space<vmem>>, %arg10: memref<4x34xf32, #tpu.memory_space<vmem>>, %arg11: memref<8x34xf32, #tpu.memory_space<vmem>>) attributes {dimension_semantics = [], scalar_prefetch = 0 : i64, scratch_operands = 2 : i64, tpu.core_type = #tpu.core_type<tc>} {
    %0 = tpu.iota {dimensions = array<i32: 1>} : vector<1x32xi32>
    %c16_i32 = arith.constant 16 : i32
    %c0_i32 = arith.constant 0 : i32
    %1 = arith.cmpi eq, %c16_i32, %c0_i32 : i32
    %c1_i32 = arith.constant 1 : i32
    %2 = arith.select %1, %c1_i32, %c16_i32 : i32
    %3 = vector.broadcast %2 : i32 to vector<1x32xi32>
    %4 = arith.remsi %0, %3 : vector<1x32xi32>
    %c0_i32_0 = arith.constant 0 : i32
    %5 = vector.broadcast %c0_i32_0 : i32 to vector<1x32xi32>
    %6 = arith.cmpi ne, %4, %5 : vector<1x32xi32>
    %c0_i32_1 = arith.constant 0 : i32
    %7 = vector.broadcast %c0_i32_1 : i32 to vector<1x32xi32>
    %8 = arith.cmpi slt, %4, %7 : vector<1x32xi32>
    %c0_i32_2 = arith.constant 0 : i32
    %9 = arith.cmpi slt, %2, %c0_i32_2 : i32
    %10 = vector.broadcast %9 : i1 to vector<1x32xi1>
    %11 = vector.broadcast %10 : vector<1x32xi1> to vector<1x32xi1>
    %12 = arith.xori %8, %11 : vector<1x32xi1>
    %13 = arith.andi %12, %6 : vector<1x32xi1>
    %14 = vector.broadcast %2 : i32 to vector<1x32xi32>
    %15 = arith.addi %4, %14 : vector<1x32xi32>
    %16 = arith.select %13, %15, %4 : vector<1x32xi1>, vector<1x32xi32>
    %c0_i32_3 = arith.constant 0 : i32
    %17 = vector.broadcast %c0_i32_3 : i32 to vector<1x32xi32>
    %18 = arith.cmpi ne, %16, %17 : vector<1x32xi32>
    %c15_i32 = arith.constant 15 : i32
    %19 = vector.broadcast %c15_i32 : i32 to vector<1x32xi32>
    %20 = arith.cmpi ne, %16, %19 : vector<1x32xi32>
    %c0 = arith.constant 0 : index
    %c0_4 = arith.constant 0 : index
    %21 = vector.load %arg0[%c0, %c0_4] : memref<4x32xf32, #tpu.memory_space<vmem>>, vector<4x32xf32>
    %c0_5 = arith.constant 0 : index
    %c1 = arith.constant 1 : index
    %22 = vector.load %arg10[%c0_5, %c1] : memref<4x34xf32, #tpu.memory_space<vmem>>, vector<4x32xf32>
    tpu.vector_store %arg10[%c0_5, %c1], %21 {strides = array<i32>} : memref<4x34xf32, #tpu.memory_space<vmem>>, vector<4x32xf32>,
    %c0_6 = arith.constant 0 : index
    %c0_7 = arith.constant 0 : index
    %23 = vector.load %arg10[%c0_6, %c0_7] : memref<4x34xf32, #tpu.memory_space<vmem>>, vector<4x32xf32>
    %cst = arith.constant 0.000000e+00 : f32
    %24 = vector.shape_cast %18 : vector<1x32xi1> to vector<1x32xi1>
    %25 = vector.broadcast %24 : vector<1x32xi1> to vector<4x32xi1>
    %26 = vector.broadcast %cst : f32 to vector<4x32xf32>
    %27 = arith.select %25, %23, %26 : vector<4x32xi1>, vector<4x32xf32>
    %c0_8 = arith.constant 0 : index
    %c2 = arith.constant 2 : index
    %28 = vector.load %arg10[%c0_8, %c2] : memref<4x34xf32, #tpu.memory_space<vmem>>, vector<4x32xf32>
    %cst_9 = arith.constant 0.000000e+00 : f32
    %29 = vector.shape_cast %20 : vector<1x32xi1> to vector<1x32xi1>
    %30 = vector.broadcast %29 : vector<1x32xi1> to vector<4x32xi1>
    %31 = vector.broadcast %cst_9 : f32 to vector<4x32xf32>
    %32 = arith.select %30, %28, %31 : vector<4x32xi1>, vector<4x32xf32>
    %33 = tpu.concatenate %27, %21, %32 in 0 : vector<4x32xf32>, vector<4x32xf32>, vector<4x32xf32> -> vector<12x32xf32>
    %c0_10 = arith.constant 0 : index
    %c0_11 = arith.constant 0 : index
    %34 = vector.load %arg1[%c0_10, %c0_11] : memref<8x12xf32, #tpu.memory_space<vmem>>, vector<8x12xf32>
    %cst_12 = arith.constant dense<0.000000e+00> : vector<8x32xf32>
    %35 = tpu.matmul %34, %33, %cst_12 {dimension_numbers = #tpu.dot_dimension_numbers<[1], [0], [0], [1], [0, 0, 1, 1], [], []>} : vector<8x12xf32>, vector<12x32xf32>, vector<8x32xf32> -> vector<8x32xf32>
    %c0_13 = arith.constant 0 : index
    %c0_14 = arith.constant 0 : index
    %36 = vector.load %arg2[%c0_13, %c0_14] : memref<8x1xf32, #tpu.memory_space<vmem>>, vector<8x1xf32>
    %37 = vector.broadcast %36 : vector<8x1xf32> to vector<8x32xf32>
    %38 = arith.addf %35, %37 : vector<8x32xf32>
    %cst_15 = arith.constant dense<0.000000e+00> : vector<8xf32>
    %39 = vector.multi_reduction <add>, %38, %cst_15 [1] : vector<8x32xf32> to vector<8xf32>
    %40 = vector.shape_cast %39 : vector<8xf32> to vector<8x1xf32>
    %cst_16 = arith.constant 3.200000e+01 : f32
    %41 = vector.broadcast %cst_16 : f32 to vector<8x1xf32>
    %42 = arith.divf %40, %41 : vector<8x1xf32>
    %43 = vector.broadcast %42 : vector<8x1xf32> to vector<8x32xf32>
    %44 = arith.subf %38, %43 : vector<8x32xf32>
    %45 = arith.mulf %44, %44 : vector<8x32xf32>
    %cst_17 = arith.constant dense<0.000000e+00> : vector<8xf32>
    %46 = vector.multi_reduction <add>, %45, %cst_17 [1] : vector<8x32xf32> to vector<8xf32>
    %47 = vector.shape_cast %46 : vector<8xf32> to vector<8x1xf32>
    %cst_18 = arith.constant 3.200000e+01 : f32
    %48 = vector.broadcast %cst_18 : f32 to vector<8x1xf32>
    %49 = arith.divf %47, %48 : vector<8x1xf32>
    %c0_19 = arith.constant 0 : index
    %c0_20 = arith.constant 0 : index
    %50 = vector.load %arg3[%c0_19, %c0_20] : memref<8x1xf32, #tpu.memory_space<vmem>>, vector<8x1xf32>
    %cst_21 = arith.constant 9.99999974E-6 : f32
    %51 = vector.broadcast %cst_21 : f32 to vector<8x1xf32>
    %52 = arith.addf %49, %51 : vector<8x1xf32>
    %53 = math.rsqrt %52 : vector<8x1xf32>
    %54 = arith.mulf %50, %53 : vector<8x1xf32>
    %55 = vector.broadcast %54 : vector<8x1xf32> to vector<8x32xf32>
    %56 = arith.mulf %44, %55 : vector<8x32xf32>
    %c0_22 = arith.constant 0 : index
    %c0_23 = arith.constant 0 : index
    %57 = vector.load %arg4[%c0_22, %c0_23] : memref<8x1xf32, #tpu.memory_space<vmem>>, vector<8x1xf32>
    %58 = vector.broadcast %57 : vector<8x1xf32> to vector<8x32xf32>
    %59 = arith.addf %56, %58 : vector<8x32xf32>
    %cst_24 = arith.constant 0.000000e+00 : f32
    %60 = vector.broadcast %cst_24 : f32 to vector<8x32xf32>
    %61 = arith.maximumf %59, %60 : vector<8x32xf32>
    %c0_25 = arith.constant 0 : index
    %c1_26 = arith.constant 1 : index
    %62 = vector.load %arg11[%c0_25, %c1_26] : memref<8x34xf32, #tpu.memory_space<vmem>>, vector<8x32xf32>
    tpu.vector_store %arg11[%c0_25, %c1_26], %61 {strides = array<i32>} : memref<8x34xf32, #tpu.memory_space<vmem>>, vector<8x32xf32>,
    %c0_27 = arith.constant 0 : index
    %c0_28 = arith.constant 0 : index
    %63 = vector.load %arg11[%c0_27, %c0_28] : memref<8x34xf32, #tpu.memory_space<vmem>>, vector<8x32xf32>
    %cst_29 = arith.constant 0.000000e+00 : f32
    %64 = vector.shape_cast %18 : vector<1x32xi1> to vector<1x32xi1>
    %65 = vector.broadcast %64 : vector<1x32xi1> to vector<8x32xi1>
    %66 = vector.broadcast %cst_29 : f32 to vector<8x32xf32>
    %67 = arith.select %65, %63, %66 : vector<8x32xi1>, vector<8x32xf32>
    %c0_30 = arith.constant 0 : index
    %c2_31 = arith.constant 2 : index
    %68 = vector.load %arg11[%c0_30, %c2_31] : memref<8x34xf32, #tpu.memory_space<vmem>>, vector<8x32xf32>
    %cst_32 = arith.constant 0.000000e+00 : f32
    %69 = vector.shape_cast %20 : vector<1x32xi1> to vector<1x32xi1>
    %70 = vector.broadcast %69 : vector<1x32xi1> to vector<8x32xi1>
    %71 = vector.broadcast %cst_32 : f32 to vector<8x32xf32>
    %72 = arith.select %70, %68, %71 : vector<8x32xi1>, vector<8x32xf32>
    %73 = tpu.concatenate %67, %61, %72 in 0 : vector<8x32xf32>, vector<8x32xf32>, vector<8x32xf32> -> vector<24x32xf32>
    %c0_33 = arith.constant 0 : index
    %c0_34 = arith.constant 0 : index
    %74 = vector.load %arg5[%c0_33, %c0_34] : memref<8x24xf32, #tpu.memory_space<vmem>>, vector<8x24xf32>
    %cst_35 = arith.constant dense<0.000000e+00> : vector<8x32xf32>
    %75 = tpu.matmul %74, %73, %cst_35 {dimension_numbers = #tpu.dot_dimension_numbers<[1], [0], [0], [1], [0, 0, 1, 1], [], []>} : vector<8x24xf32>, vector<24x32xf32>, vector<8x32xf32> -> vector<8x32xf32>
    %c0_36 = arith.constant 0 : index
    %c0_37 = arith.constant 0 : index
    %76 = vector.load %arg6[%c0_36, %c0_37] : memref<8x1xf32, #tpu.memory_space<vmem>>, vector<8x1xf32>
    %77 = vector.broadcast %76 : vector<8x1xf32> to vector<8x32xf32>
    %78 = arith.addf %75, %77 : vector<8x32xf32>
    %cst_38 = arith.constant dense<0.000000e+00> : vector<8xf32>
    %79 = vector.multi_reduction <add>, %78, %cst_38 [1] : vector<8x32xf32> to vector<8xf32>
    %80 = vector.shape_cast %79 : vector<8xf32> to vector<8x1xf32>
    %cst_39 = arith.constant 3.200000e+01 : f32
    %81 = vector.broadcast %cst_39 : f32 to vector<8x1xf32>
    %82 = arith.divf %80, %81 : vector<8x1xf32>
    %83 = vector.broadcast %82 : vector<8x1xf32> to vector<8x32xf32>
    %84 = arith.subf %78, %83 : vector<8x32xf32>
    %85 = arith.mulf %84, %84 : vector<8x32xf32>
    %cst_40 = arith.constant dense<0.000000e+00> : vector<8xf32>
    %86 = vector.multi_reduction <add>, %85, %cst_40 [1] : vector<8x32xf32> to vector<8xf32>
    %87 = vector.shape_cast %86 : vector<8xf32> to vector<8x1xf32>
    %cst_41 = arith.constant 3.200000e+01 : f32
    %88 = vector.broadcast %cst_41 : f32 to vector<8x1xf32>
    %89 = arith.divf %87, %88 : vector<8x1xf32>
    %c0_42 = arith.constant 0 : index
    %c0_43 = arith.constant 0 : index
    %90 = vector.load %arg7[%c0_42, %c0_43] : memref<8x1xf32, #tpu.memory_space<vmem>>, vector<8x1xf32>
    %cst_44 = arith.constant 9.99999974E-6 : f32
    %91 = vector.broadcast %cst_44 : f32 to vector<8x1xf32>
    %92 = arith.addf %89, %91 : vector<8x1xf32>
    %93 = math.rsqrt %92 : vector<8x1xf32>
    %94 = arith.mulf %90, %93 : vector<8x1xf32>
    %95 = vector.broadcast %94 : vector<8x1xf32> to vector<8x32xf32>
    %96 = arith.mulf %84, %95 : vector<8x32xf32>
    %c0_45 = arith.constant 0 : index
    %c0_46 = arith.constant 0 : index
    %97 = vector.load %arg8[%c0_45, %c0_46] : memref<8x1xf32, #tpu.memory_space<vmem>>, vector<8x1xf32>
    %98 = vector.broadcast %97 : vector<8x1xf32> to vector<8x32xf32>
    %99 = arith.addf %96, %98 : vector<8x32xf32>
    %cst_47 = arith.constant 0.000000e+00 : f32
    %100 = vector.broadcast %cst_47 : f32 to vector<8x32xf32>
    %101 = arith.maximumf %99, %100 : vector<8x32xf32>
    %c0_48 = arith.constant 0 : index
    %c0_49 = arith.constant 0 : index
    %102 = vector.load %arg9[%c0_48, %c0_49] : memref<8x32xf32, #tpu.memory_space<vmem>>, vector<8x32xf32>
    tpu.vector_store %arg9[%c0_48, %c0_49], %101 {strides = array<i32>} : memref<8x32xf32, #tpu.memory_space<vmem>>, vector<8x32xf32>,
    return
  }
}

</mosaic_0001>

<llo_original>
// kernel: double_conv.1
$region0: #{double_conv.1}
  #allocation0 [shape = 'u32[]', space=smem, size = 0x4, offset = 0x4, fixed_abs, tag = 'smem constant byte address 0x4 - core index']
  #allocation1 [shape = 'u32[144,128]{1,0:T(1,128)}', space=vmem, size = 0x12000, scoped, tag = 'internal scratch']
  #allocation2 [shape = 'f32[4,34]{1,0:T(4,128)}', space=vmem, size = 0x800, scoped, tag = 'scratch operand']
  #allocation3 [shape = 'f32[8,34]{1,0:T(8,128)}', space=vmem, size = 0x1000, scoped, tag = 'scratch operand']
  %s0 = inlined_call_operand.vmem [shape: f32[4,32], index: 0, kind: input, shape index: {}]
  %s1 = inlined_call_operand.vmem [shape: f32[8,12], index: 1, kind: input, shape index: {}]
  %s2 = inlined_call_operand.vmem [shape: f32[8,1], index: 2, kind: input, shape index: {}]
  %s3 = inlined_call_operand.vmem [shape: f32[8,1], index: 3, kind: input, shape index: {}]
  %s4 = inlined_call_operand.vmem [shape: f32[8,1], index: 4, kind: input, shape index: {}]
  %s5 = inlined_call_operand.vmem [shape: f32[8,24], index: 5, kind: input, shape index: {}]
  %s6 = inlined_call_operand.vmem [shape: f32[8,1], index: 6, kind: input, shape index: {}]
  %s7 = inlined_call_operand.vmem [shape: f32[8,1], index: 7, kind: input, shape index: {}]
  %s8 = inlined_call_operand.vmem [shape: f32[8,1], index: 8, kind: input, shape index: {}]
  %s9 = inlined_call_operand.vmem [shape: f32[8,32], index: 9, kind: output, shape index: {}]
  %s10 = sld [smem:[#allocation0]]
  $region46: #{double_conv.1} parent=0
    _
  %s12 = ssub.s32 1, %s10
  %s13 = scalar_select 0, %s12, %s10
  // Predicated region
  $region2: #{double_conv.1} parent=0 // pred_check
    _
  $region3: #{double_conv.1} parent=0 // pred_check_branch
    %15 = sbr.rel (0) target = $region5
  $region4: #{double_conv.1} parent=0 // pred_region
    _
  $region5: #{double_conv.1} parent=0 // pred_fallthru
    _
  // Predicated region
  $region6: #{double_conv.1} parent=0 // pred_check
    _
  $region7: #{double_conv.1} parent=0 // pred_check_branch
    %17 = sbr.rel (0) target = $region9
  $region8: #{double_conv.1} parent=0 // pred_region
    _
  $region9: #{double_conv.1} parent=0 // pred_fallthru
    _
  // Predicated region
  $region10: #{double_conv.1} parent=0 // pred_check
    _
  $region11: #{double_conv.1} parent=0 // pred_check_branch
    %19 = sbr.rel (0) target = $region13
  $region12: #{double_conv.1} parent=0 // pred_region
    _
  $region13: #{double_conv.1} parent=0 // pred_fallthru
    _
  // Predicated region
  $region14: #{double_conv.1} parent=0 // pred_check
    _
  $region15: #{double_conv.1} parent=0 // pred_check_branch
    %21 = sbr.rel (0) target = $region17
  $region16: #{double_conv.1} parent=0 // pred_region
    _
  $region17: #{double_conv.1} parent=0 // pred_fallthru
    _
  // Predicated region
  $region18: #{double_conv.1} parent=0 // pred_check
    _
  $region19: #{double_conv.1} parent=0 // pred_check_branch
    %23 = sbr.rel (0) target = $region21
  $region20: #{double_conv.1} parent=0 // pred_region
    _
  $region21: #{double_conv.1} parent=0 // pred_fallthru
    _
  // Predicated region
  $region22: #{double_conv.1} parent=0 // pred_check
    _
  $region23: #{double_conv.1} parent=0 // pred_check_branch
    %25 = sbr.rel (0) target = $region25
  $region24: #{double_conv.1} parent=0 // pred_region
    _
  $region25: #{double_conv.1} parent=0 // pred_fallthru
    _
  // Predicated region
  $region26: #{double_conv.1} parent=0 // pred_check
    _
  $region27: #{double_conv.1} parent=0 // pred_check_branch
    %27 = sbr.rel (0) target = $region29
  $region28: #{double_conv.1} parent=0 // pred_region
    _
  $region29: #{double_conv.1} parent=0 // pred_fallthru
    _
  // Predicated region
  $region30: #{double_conv.1} parent=0 // pred_check
    _
  $region31: #{double_conv.1} parent=0 // pred_check_branch
    %29 = sbr.rel (0) target = $region33
  $region32: #{double_conv.1} parent=0 // pred_region
    _
  $region33: #{double_conv.1} parent=0 // pred_fallthru
    _
  // Predicated region
  $region34: #{double_conv.1} parent=0 // pred_check
    _
  $region35: #{double_conv.1} parent=0 // pred_check_branch
    %31 = sbr.rel (0) target = $region37
  $region36: #{double_conv.1} parent=0 // pred_region
    _
  $region37: #{double_conv.1} parent=0 // pred_fallthru
    _
  %v32 = vlaneseq
  %v33 = vand.u32 %v32, 127
  %vm34 = vcmp.lt.s32.totalorder %v33, 0
  %v35 = vsub.s32 0, %v33
  %v36 = vsel %vm34, %v35, %v33
  %v37 = vshrl.u32 %v36, 4
  %v38 = vand.u32 %v36, 15
  %v39 = vsub.s32 0, %v38
  %v40 = vsel %vm34, %v39, %v38
  %vm41 = vcmp.ne.s32.totalorder %v40, 0
  %vm42 = vcmp.lt.s32.totalorder %v40, 0
  %vm43 = vmand %vm42, %vm41
  %v44 = vadd.s32 %v40, 16
  %v45 = vsel %vm43, %v44, %v40
  %vm46 = vcmp.ne.s32.totalorder %v45, 0
  %vm47 = vcmp.ne.s32.totalorder %v45, 15
  %v48 = vld [vmem:[%s0] sm:$0xf]
  %50 = vrot.lane.b32.xlu0 %v48, 1
  %v51 = vpop.permute.xlu0 %50
  %vm53 = vcmask 265224
  %54 = vst.msk [vmem:[#allocation2] sm:$0xf] %vm53, %v51
  %v55 = vld [vmem:[#allocation2] sm:$0xf]
  %v56 = vsel %vm46, 1, 0
  %vm57 = vcmp.eq.s32.totalorder %v56, 1
  %v58 = vsel %vm57, %v55, 0.0
  %v59 = vsel %vm47, 1, 0
  %vm60 = vcmp.eq.s32.totalorder %v59, 1
  %62 = vrot.lane.b32.xlu0 %v55, 126
  %v63 = vpop.permute.xlu0 %62
  %v65 = vsel %vm60, %v63, 0.0
  %v66 = vrot.slane %v48, 4
  %vm68 = vcmask 1043456
  %v69 = vsel %vm68, %v58, %v66
  %v70 = vld [vmem:[%s1] sm:$0xff]
  %v71 = vld [vmem:[%s2] sm:$0xff]
  %73 = vset.pattern.permute.xlu0 0
  %74 = vperm.xlu0 %73, %v71
  %v75 = vpop.permute.xlu0 %74
  %vm77 = vcmask 97280
  %v79 = vsel %vm77, %v70, 0
  %v82 = vsel %vm68, %v65, 0
  %84 = vmatprep.subr.mxu0 0.0
  %85 = vmatpush1.msra.mxu0 %v69
  %86 = vmatprep.subr.mxu0 0.0
  %87 = vmatpush1.msra.mxu0 %v82
  %88 = vmatprep.subr.mxu0 0.0
  %89 = vmatpush1.msra.mxu0 0.0
  %90 = vmatprep.subr.mxu0 0.0
  %91 = vmatpush1.msra.mxu0 0.0
  %92 = vmatprep.subr.mxu0 0.0
  %93 = vmatpush1.msra.mxu0 0.0
  %94 = vmatprep.subr.mxu0 0.0
  %95 = vmatpush1.msra.mxu0 0.0
  %96 = vmatprep.subr.mxu0 0.0
  %97 = vmatpush1.msra.mxu0 0.0
  %98 = vmatprep.subr.mxu0 0.0
  %99 = vmatpush1.msra.mxu0 0.0
  %100 = vmatprep.subr.mxu0 0.0
  %101 = vmatpush1.msra.mxu0 0.0
  %102 = vmatprep.subr.mxu0 0.0
  %103 = vmatpush1.msra.mxu0 0.0
  %104 = vmatprep.subr.mxu0 0.0
  %105 = vmatpush1.msra.mxu0 0.0
  %106 = vmatprep.subr.mxu0 0.0
  %107 = vmatpush1.msra.mxu0 0.0
  %108 = vmatprep.subr.mxu0 0.0
  %109 = vmatpush1.msra.mxu0 0.0
  %110 = vmatprep.subr.mxu0 0.0
  %111 = vmatpush1.msra.mxu0 0.0
  %112 = vmatprep.subr.mxu0 0.0
  %113 = vmatpush1.msra.mxu0 0.0
  %114 = vmatprep.subr.mxu0 0.0
  %115 = vmatpush1.msra.mxu0 0.0
  %116 = vmatprep.subr.mxu0 0.0
  %117 = vmatpush1.msra.mxu0 0.0
  %118 = vmatprep.subr.mxu0 0.0
  %119 = vmatpush1.msra.mxu0 0.0
  %120 = vmatprep.subr.mxu0 0.0
  %121 = vmatpush1.msra.mxu0 0.0
  %122 = vmatprep.subr.mxu0 0.0
  %123 = vmatpush1.msra.mxu0 0.0
  %124 = vmatprep.subr.mxu0 0.0
  %125 = vmatpush1.msra.mxu0 0.0
  %126 = vmatprep.subr.mxu0 0.0
  %127 = vmatpush1.msra.mxu0 0.0
  %128 = vmatprep.subr.mxu0 0.0
  %129 = vmatpush1.msra.mxu0 0.0
  %130 = vmatprep.subr.mxu0 0.0
  %131 = vmatpush1.msra.mxu0 0.0
  %132 = vmatprep.subr.mxu0 0.0
  %133 = vmatpush1.msra.mxu0 0.0
  %134 = vmatprep.subr.mxu0 0.0
  %135 = vmatpush1.msra.mxu0 0.0
  %136 = vmatprep.subr.mxu0 0.0
  %137 = vmatpush1.msra.mxu0 0.0
  %138 = vmatprep.subr.mxu0 0.0
  %139 = vmatpush1.msra.mxu0 0.0
  %140 = vmatprep.subr.mxu0 0.0
  %141 = vmatpush1.msra.mxu0 0.0
  %142 = vmatprep.subr.mxu0 0.0
  %143 = vmatpush1.msra.mxu0 0.0
  %144 = vmatprep.subr.mxu0 0.0
  %145 = vmatpush1.msra.mxu0 0.0
  %146 = vmatprep.subr.mxu0 0.0
  %147 = vmatpush1.msra.mxu0 0.0
  %148 = vmatprep.mubr.f32.mxu0 0.0
  %149 = vmatmul.mubr.f32.gmra.mrb[0].mxu0 %v79
  %v150 = vpop.f32.mrb[0].mxu0
  %v151 = vadd.f32 %v75, %v150
  %v152 = vpop.f32.mrb[0].mxu0
  %153 = vdwg.mxu0
  %vm154 = vcmask 261120
  %v155 = vsel %vm154, %v151, 0.0
  %156 = vadd.xlane.f32.xlu0 %v155
  %v157 = vpop.xlane.xlu0 %156
  %v158 = vrcp.pop 32.0
  %v159 = vmul.f32 %v157, %v158
  %v160 = vsub.f32 %v151, %v159
  %v161 = vmul.f32 %v160, %v160
  %v162 = vsel %vm154, %v161, 0.0
  %163 = vadd.xlane.f32.xlu0 %v162
  %v164 = vpop.xlane.xlu0 %163
  %v165 = vmul.f32 %v164, %v158
  %v166 = vld [vmem:[%s3] sm:$0xff]
  %v167 = vadd.f32 %v165, 1e-05
  %v168 = vrsqrt.pop %v167
  %v169 = vmul.f32 %v166, %v168
  %171 = vset.pattern.permute.xlu0 0
  %172 = vperm.xlu0 %171, %v169
  %v173 = vpop.permute.xlu0 %172
  %v175 = vmul.f32 %v160, %v173
  %v176 = vld [vmem:[%s4] sm:$0xff]
  %178 = vset.pattern.permute.xlu0 0
  %179 = vperm.xlu0 %178, %v176
  %v180 = vpop.permute.xlu0 %179
  %v182 = vadd.f32 %v175, %v180
  %v183 = vmax.f32 %v182, 0.0
  %185 = vrot.lane.b32.xlu0 %v183, 1
  %v186 = vpop.permute.xlu0 %185
  %vm188 = vcmask 269320
  %189 = vst.msk [vmem:[#allocation3] sm:$0xff] %vm188, %v186
  %v190 = vld [vmem:[#allocation3] sm:$0xff]
  %v191 = vsel %vm57, %v190, 0.0
  %193 = vrot.lane.b32.xlu0 %v190, 126
  %v194 = vpop.permute.xlu0 %193
  %v196 = vsel %vm60, %v194, 0.0
  %v197 = vld [vmem:[%s5] sm:$0xff]
  %v198 = vld [vmem:[%s6] sm:$0xff]
  %200 = vset.pattern.permute.xlu0 0
  %201 = vperm.xlu0 %200, %v198
  %v202 = vpop.permute.xlu0 %201
  %vm204 = vcmask 195584
  %v206 = vsel %vm204, %v197, 0
  %208 = vmatprep.subr.mxu0 0.0
  %209 = vmatpush1.msra.mxu0 %v191
  %210 = vmatprep.subr.mxu0 0.0
  %211 = vmatpush1.msra.mxu0 %v183
  %212 = vmatprep.subr.mxu0 0.0
  %213 = vmatpush1.msra.mxu0 %v196
  %214 = vmatprep.subr.mxu0 0.0
  %215 = vmatpush1.msra.mxu0 0.0
  %216 = vmatprep.subr.mxu0 0.0
  %217 = vmatpush1.msra.mxu0 0.0
  %218 = vmatprep.subr.mxu0 0.0
  %219 = vmatpush1.msra.mxu0 0.0
  %220 = vmatprep.subr.mxu0 0.0
  %221 = vmatpush1.msra.mxu0 0.0
  %222 = vmatprep.subr.mxu0 0.0
  %223 = vmatpush1.msra.mxu0 0.0
  %224 = vmatprep.subr.mxu0 0.0
  %225 = vmatpush1.msra.mxu0 0.0
  %226 = vmatprep.subr.mxu0 0.0
  %227 = vmatpush1.msra.mxu0 0.0
  %228 = vmatprep.subr.mxu0 0.0
  %229 = vmatpush1.msra.mxu0 0.0
  %230 = vmatprep.subr.mxu0 0.0
  %231 = vmatpush1.msra.mxu0 0.0
  %232 = vmatprep.subr.mxu0 0.0
  %233 = vmatpush1.msra.mxu0 0.0
  %234 = vmatprep.subr.mxu0 0.0
  %235 = vmatpush1.msra.mxu0 0.0
  %236 = vmatprep.subr.mxu0 0.0
  %237 = vmatpush1.msra.mxu0 0.0
  %238 = vmatprep.subr.mxu0 0.0
  %239 = vmatpush1.msra.mxu0 0.0
  %240 = vmatprep.subr.mxu0 0.0
  %241 = vmatpush1.msra.mxu0 0.0
  %242 = vmatprep.subr.mxu0 0.0
  %243 = vmatpush1.msra.mxu0 0.0
  %244 = vmatprep.subr.mxu0 0.0
  %245 = vmatpush1.msra.mxu0 0.0
  %246 = vmatprep.subr.mxu0 0.0
  %247 = vmatpush1.msra.mxu0 0.0
  %248 = vmatprep.subr.mxu0 0.0
  %249 = vmatpush1.msra.mxu0 0.0
  %250 = vmatprep.subr.mxu0 0.0
  %251 = vmatpush1.msra.mxu0 0.0
  %252 = vmatprep.subr.mxu0 0.0
  %253 = vmatpush1.msra.mxu0 0.0
  %254 = vmatprep.subr.mxu0 0.0
  %255 = vmatpush1.msra.mxu0 0.0
  %256 = vmatprep.subr.mxu0 0.0
  %257 = vmatpush1.msra.mxu0 0.0
  %258 = vmatprep.subr.mxu0 0.0
  %259 = vmatpush1.msra.mxu0 0.0
  %260 = vmatprep.subr.mxu0 0.0
  %261 = vmatpush1.msra.mxu0 0.0
  %262 = vmatprep.subr.mxu0 0.0
  %263 = vmatpush1.msra.mxu0 0.0
  %264 = vmatprep.subr.mxu0 0.0
  %265 = vmatpush1.msra.mxu0 0.0
  %266 = vmatprep.subr.mxu0 0.0
  %267 = vmatpush1.msra.mxu0 0.0
  %268 = vmatprep.subr.mxu0 0.0
  %269 = vmatpush1.msra.mxu0 0.0
  %270 = vmatprep.subr.mxu0 0.0
  %271 = vmatpush1.msra.mxu0 0.0
  %272 = vmatprep.mubr.f32.mxu0 0.0
  %273 = vmatmul.mubr.f32.gmra.mrb[0].mxu0 %v206
  %v274 = vpop.f32.mrb[0].mxu0
  %v275 = vadd.f32 %v202, %v274
  %v276 = vpop.f32.mrb[0].mxu0
  %277 = vdwg.mxu0
  %v278 = vsel %vm154, %v275, 0.0
  %279 = vadd.xlane.f32.xlu0 %v278
  %v280 = vpop.xlane.xlu0 %279
  %v281 = vmul.f32 %v280, %v158
  %v282 = vsub.f32 %v275, %v281
  %v283 = vmul.f32 %v282, %v282
  %v284 = vsel %vm154, %v283, 0.0
  %285 = vadd.xlane.f32.xlu0 %v284
  %v286 = vpop.xlane.xlu0 %285
  %v287 = vmul.f32 %v286, %v158
  %v288 = vld [vmem:[%s7] sm:$0xff]
  %v289 = vadd.f32 %v287, 1e-05
  %v290 = vrsqrt.pop %v289
  %v291 = vmul.f32 %v288, %v290
  %293 = vset.pattern.permute.xlu0 0
  %294 = vperm.xlu0 %293, %v291
  %v295 = vpop.permute.xlu0 %294
  %v297 = vmul.f32 %v282, %v295
  %v298 = vld [vmem:[%s8] sm:$0xff]
  %300 = vset.pattern.permute.xlu0 0
  %301 = vperm.xlu0 %300, %v298
  %v302 = vpop.permute.xlu0 %301
  %v304 = vadd.f32 %v297, %v302
  %v305 = vmax.f32 %v304, 0.0
  %306 = vst.msk [vmem:[%s9] sm:$0xff] %vm154, %v305
  // Predicated region
  $region38: #{double_conv.1} parent=0 // pred_check
    _
  $region39: #{double_conv.1} parent=0 // pred_check_branch
    %308 = sbr.rel (0) target = $region41
  $region40: #{double_conv.1} parent=0 // pred_region
    _
  $region41: #{double_conv.1} parent=0 // pred_fallthru
    _
  // Predicated region
  $region42: #{double_conv.1} parent=0 // pred_check
    _
  $region43: #{double_conv.1} parent=0 // pred_check_branch
    %310 = sbr.rel (0) target = $region45
  $region44: #{double_conv.1} parent=0 // pred_region
    _
  $region45: #{double_conv.1} parent=0 // pred_fallthru
    _

</llo_original>
